<compile_context>
chip_gen: v7x
topology: tpu7x:2x2x1
jax: 0.10.0
libtpu: 0.0.40
codegen_flags: <defaults>
</compile_context>

<pallas_src>
from functools import partial

import numpy as np
import jax
import jax.numpy as jnp
from jax.experimental import pallas as pl
from jax.experimental.pallas import tpu as pltpu


def _rank_kernel(pt_ref, w1a_ref, pbias_ref, w2_ref, b2_ref, out_ref):
    # pt_ref:    (2F, Tn)   bf16  pair features for this (batch, lane-tile)
    # w1a_ref:   (Rp, 2F)   bf16  W1[:, :2F] (torch (out,in)), rows zero-padded
    # pbias_ref: (Rp, Tn)   f32   W1[:, 2F:] @ (ker @ emb)^T + b1[:, None]
    # w2_ref:    (Rp, 1)    f32   W2 as a column, rows zero-padded
    # b2_ref:    (1, 1)     f32   SMEM scalar
    # out_ref:   (1, Tn)    f32   lane-dense predictions
    h = jnp.dot(w1a_ref[...], pt_ref[...],
                preferred_element_type=jnp.float32)            # (Rp, Tn)  MXU
    h = jnp.maximum(h + pbias_ref[...], 0.0)                   # ReLU(rank_layer1)
    # rank_layer2 (output dim 1): weighted sublane reduce on VPU/XLU — keeps
    # h in f32 (no cast pass) and leaves the MXU slot free.
    pred = jnp.sum(h * w2_ref[...], axis=0, keepdims=True)     # (1, Tn)
    out_ref[...] = pred + b2_ref[0, 0]


def _static_couples(seq_len, K):
    """Static (numpy) version of couple_generator index bookkeeping."""
    idx = np.arange(seq_len)                      # 0-based; +1 for emo_cau_pos
    emo = np.repeat(idx, seq_len)                 # i of pair (i, j)
    cau = np.tile(idx, seq_len)                   # j of pair (i, j)
    rel = cau - emo
    if seq_len > K + 1:
        keep = np.abs(rel) <= K
        emo, cau, rel = emo[keep], cau[keep], rel[keep]
    return emo, cau, rel


def _round_up(x, m):
    return ((x + m - 1) // m) * m


@partial(jax.jit, static_argnames=("K",))
def _rank_forward_impl(doc_sents_h, pos_emb, W1, b1, W2, b2, *, K):
    batch, seq_len, feat_dim = doc_sents_h.shape
    R = W1.shape[0]
    two_f = 2 * feat_dim

    # ---- static couple generation (glue, shapes are compile-time) ----
    emo, cau, rel = _static_couples(seq_len, K)
    n_couple = int(rel.shape[0])

    # ---- lane tiling: pair dim on lanes, tiled so the per-step working set
    #      stays bounded on v7x and batch==1 still fills both cores ----
    TILE_N = min(512, _round_up(n_couple, 128))
    n_pad = _round_up(n_couple, TILE_N)
    n_tiles = n_pad // TILE_N
    R_pad = _round_up(R, 16)          # sublane-clean for bf16 and f32 tiles

    # ---- batch-invariant position path, hoisted out of the kernel ----
    d = rel.astype(np.float32)
    ker = jnp.asarray(np.exp(-np.square(d[:, None] - d[None, :])), jnp.float32)  # (N,N)
    emb = pos_emb[rel + K].astype(jnp.float32)                                   # (N,E)
    pos = ker @ emb                                                              # (N,E)
    # pos_bias^T = W1[:, 2F:] @ pos^T + b1[:, None], padded to (Rp, Np), f32.
    pbiasT = (W1[:, two_f:].astype(jnp.float32) @ pos.T
              + b1.astype(jnp.float32)[:, None])                                 # (R,N)
    pbiasT = jnp.pad(pbiasT, ((0, R_pad - R), (0, n_pad - n_couple)))            # (Rp,Np)

    # ---- pair features built directly in the transposed bf16 layout:
    #      transpose/cast the small array first, then gather/concat/pad ----
    dT = jnp.swapaxes(doc_sents_h, 1, 2).astype(jnp.bfloat16)                    # (B,F,S)
    PT = jnp.concatenate([dT[:, :, emo], dT[:, :, cau]], axis=1)                 # (B,2F,N)
    PT = jnp.pad(PT, ((0, 0), (0, 0), (0, n_pad - n_couple)))                    # (B,2F,Np)

    w1a = jnp.pad(W1[:, :two_f],
                  ((0, R_pad - R), (0, 0))).astype(jnp.bfloat16)                 # (Rp,2F)
    w2c = jnp.pad(W2.reshape(R, 1),
                  ((0, R_pad - R), (0, 0))).astype(jnp.float32)                  # (Rp,1)
    b2s = b2.reshape(1, 1).astype(jnp.float32)                                   # SMEM

    # NOTE: w1a / w2c have constant index maps (fetched once per kernel run);
    # if scoped VMEM gets tight at very large feat_dim on v7x, they can be
    # single-buffered via pipeline_mode=pl.Buffered(1).
    out = pl.pallas_call(
        _rank_kernel,
        out_shape=jax.ShapeDtypeStruct((batch, 1, n_pad), jnp.float32),
        grid_spec=pltpu.PrefetchScalarGridSpec(
            num_scalar_prefetch=0,
            grid=(batch, n_tiles),
            in_specs=[
                pl.BlockSpec((pl.Squeezed(), two_f, TILE_N),
                             lambda b, n: (b, 0, n)),
                pl.BlockSpec((R_pad, two_f), lambda b, n: (0, 0)),
                pl.BlockSpec((R_pad, TILE_N), lambda b, n: (0, n)),
                pl.BlockSpec((R_pad, 1), lambda b, n: (0, 0)),
                pl.BlockSpec(memory_space=pltpu.MemorySpace.SMEM),
            ],
            out_specs=pl.BlockSpec((pl.Squeezed(), 1, TILE_N),
                                   lambda b, n: (b, 0, n)),
        ),
        compiler_params=pltpu.CompilerParams(
            dimension_semantics=("parallel", "parallel"),
            vmem_limit_bytes=64 * 1024 * 1024,
        ),
    )(PT, w1a, pbiasT, w2c, b2s)

    return out[:, 0, :n_couple]


def rank_forward(doc_sents_h, params, K):
    seq_len = doc_sents_h.shape[1]
    emo, cau, _ = _static_couples(seq_len, K)
    emo_cau_pos = [[int(e) + 1, int(c) + 1] for e, c in zip(emo, cau)]
    pred = _rank_forward_impl(doc_sents_h, params["pos_emb"], params["w1"],
                              params["b1"], params["w2"], params["b2"], K=K)
    return pred, emo_cau_pos


def ref_forward(doc_sents_h, params, K):
    """Pure-JAX f32 reference replicating the PyTorch forward semantics."""
    batch, seq_len, feat_dim = doc_sents_h.shape
    emo, cau, rel = _static_couples(seq_len, K)
    P = jnp.concatenate([doc_sents_h[:, emo, :], doc_sents_h[:, cau, :]], axis=-1)
    rel_pos_emb = params["pos_emb"][rel + K]                      # (N, E)
    d = rel.astype(np.float32)
    ker = jnp.asarray(np.exp(-np.square(d[:, None] - d[None, :])), jnp.float32)
    rel_pos_emb = jnp.einsum("nm,me->ne", ker, rel_pos_emb)       # batch-invariant
    rel_pos_emb = jnp.broadcast_to(rel_pos_emb[None], (batch,) + rel_pos_emb.shape)
    couples = jnp.concatenate([P, rel_pos_emb], axis=-1)
    h = jax.nn.relu(jnp.einsum("bnr,sr->bns", couples, params["w1"]) + params["b1"])
    pred = jnp.einsum("bnr,sr->bns", h, params["w2"]) + params["b2"]
    return pred[..., 0]


def init_params(key, K, pos_emb_dim, feat_dim):
    rank_feat_dim = 2 * feat_dim + pos_emb_dim
    k_emb, k_w1, k_b1, k_w2, k_b2 = jax.random.split(key, 5)
    # xavier_uniform for the embedding table
    bound_e = float(np.sqrt(6.0 / (2 * K + 1 + pos_emb_dim)))
    pos_emb = jax.random.uniform(k_emb, (2 * K + 1, pos_emb_dim),
                                 jnp.float32, -bound_e, bound_e)
    # Linear layers (torch default-style uniform bound 1/sqrt(fan_in))
    b_lin = float(1.0 / np.sqrt(rank_feat_dim))
    w1 = jax.random.uniform(k_w1, (rank_feat_dim, rank_feat_dim),
                            jnp.float32, -b_lin, b_lin)
    b1 = jax.random.uniform(k_b1, (rank_feat_dim,), jnp.float32, -b_lin, b_lin)
    w2 = jax.random.uniform(k_w2, (1, rank_feat_dim), jnp.float32, -b_lin, b_lin)
    b2 = jax.random.uniform(k_b2, (1,), jnp.float32, -b_lin, b_lin)
    return {"pos_emb": pos_emb, "w1": w1, "b1": b1, "w2": w2, "b2": b2}


if __name__ == "__main__":
    # small shapes consistent with the module
    batch, seq_len, feat_dim = 2, 8, 16
    K, pos_emb_dim = 3, 16

    key = jax.random.PRNGKey(0)
    k_x, k_p = jax.random.split(key)
    doc_sents_h = jax.random.normal(k_x, (batch, seq_len, feat_dim), jnp.float32)
    params = init_params(k_p, K, pos_emb_dim, feat_dim)

    couples_pred, emo_cau_pos = rank_forward(doc_sents_h, params, K)
    couples_pred = jax.block_until_ready(couples_pred)

    ref = jax.block_until_ready(ref_forward(doc_sents_h, params, K))
    assert couples_pred.shape == ref.shape
    assert len(emo_cau_pos) == couples_pred.shape[1]
    # bf16 MXU operands (layer 1 only) with f32 accumulation; layer 2 is
    # fully f32 now -> tighter tolerance than the previous bf16 version.
    np.testing.assert_allclose(np.asarray(couples_pred), np.asarray(ref),
                               rtol=3e-2, atol=3e-2)
    print("KERNEL_OK")
</pallas_src>

<mosaic_0001>
module attributes {stable_mosaic.version = 11 : i64} {
  func.func @_rank_kernel(%arg0: i32, %arg1: i32, %arg2: memref<1x32x128xbf16, #tpu.memory_space<vmem>>, %arg3: memref<48x32xbf16, #tpu.memory_space<vmem>>, %arg4: memref<48x128xf32, #tpu.memory_space<vmem>>, %arg5: memref<48x1xf32, #tpu.memory_space<vmem>>, %arg6: memref<1x1xf32, #tpu.memory_space<smem>>, %arg7: memref<1x1x128xf32, #tpu.memory_space<vmem>>) attributes {dimension_semantics = [#tpu.dimension_semantics<parallel>, #tpu.dimension_semantics<parallel>], iteration_bounds = array<i64: 2, 1>, scalar_prefetch = 0 : i64, scratch_operands = 0 : i64, tpu.core_type = #tpu.core_type<tc>, window_params = [{transform_indices = @transform_0, window_bounds = array<i64: 1, 32, 128>}, {pipeline_mode = #tpu.pipeline_mode<synchronous>, transform_indices = @transform_1, window_bounds = array<i64: 48, 32>}, {transform_indices = @transform_2, window_bounds = array<i64: 48, 128>}, {pipeline_mode = #tpu.pipeline_mode<synchronous>, transform_indices = @transform_3, window_bounds = array<i64: 48, 1>}, {transform_indices = @transform_4, window_bounds = array<i64: 1, 1>}, {transform_indices = @transform_5, window_bounds = array<i64: 1, 1, 128>}]} {
    %c0 = arith.constant 0 : index
    %c0_0 = arith.constant 0 : index
    %0 = vector.load %arg3[%c0, %c0_0] : memref<48x32xbf16, #tpu.memory_space<vmem>>, vector<48x32xbf16>
    %c0_1 = arith.constant 0 : index
    %c0_2 = arith.constant 0 : index
    %c0_3 = arith.constant 0 : index
    %1 = vector.load %arg2[%c0_1, %c0_2, %c0_3] : memref<1x32x128xbf16, #tpu.memory_space<vmem>>, vector<1x32x128xbf16>
    %2 = vector.shape_cast %1 : vector<1x32x128xbf16> to vector<32x128xbf16>
    %cst = arith.constant dense<0.000000e+00> : vector<48x128xf32>
    %3 = tpu.matmul %0, %2, %cst {dimension_numbers = #tpu.dot_dimension_numbers<[1], [0], [0], [1], [0, 0, 1, 1], [], []>} : vector<48x32xbf16>, vector<32x128xbf16>, vector<48x128xf32> -> vector<48x128xf32>
    %c0_4 = arith.constant 0 : index
    %c0_5 = arith.constant 0 : index
    %4 = vector.load %arg4[%c0_4, %c0_5] : memref<48x128xf32, #tpu.memory_space<vmem>>, vector<48x128xf32>
    %5 = arith.addf %3, %4 : vector<48x128xf32>
    %cst_6 = arith.constant 0.000000e+00 : f32
    %6 = vector.broadcast %cst_6 : f32 to vector<48x128xf32>
    %7 = arith.maximumf %5, %6 : vector<48x128xf32>
    %c0_7 = arith.constant 0 : index
    %c0_8 = arith.constant 0 : index
    %8 = vector.load %arg5[%c0_7, %c0_8] : memref<48x1xf32, #tpu.memory_space<vmem>>, vector<48x1xf32>
    %9 = vector.broadcast %8 : vector<48x1xf32> to vector<48x128xf32>
    %10 = arith.mulf %7, %9 : vector<48x128xf32>
    %cst_9 = arith.constant dense<0.000000e+00> : vector<128xf32>
    %11 = vector.multi_reduction <add>, %10, %cst_9 [0] : vector<48x128xf32> to vector<128xf32>
    %12 = vector.shape_cast %11 : vector<128xf32> to vector<1x128xf32>
    %c0_10 = arith.constant 0 : index
    %c0_11 = arith.constant 0 : index
    %13 = memref.load %arg6[%c0_10, %c0_11] : memref<1x1xf32, #tpu.memory_space<smem>>
    %14 = vector.broadcast %13 : f32 to vector<1x128xf32>
    %15 = arith.addf %12, %14 : vector<1x128xf32>
    %c0_12 = arith.constant 0 : index
    %c0_13 = arith.constant 0 : index
    %c0_14 = arith.constant 0 : index
    %16 = vector.load %arg7[%c0_12, %c0_13, %c0_14] : memref<1x1x128xf32, #tpu.memory_space<vmem>>, vector<1x1x128xf32>
    %17 = vector.shape_cast %16 : vector<1x1x128xf32> to vector<1x128xf32>
    %18 = vector.shape_cast %15 : vector<1x128xf32> to vector<1x1x128xf32>
    tpu.vector_store %arg7[%c0_12, %c0_13, %c0_14], %18 {strides = array<i32>} : memref<1x1x128xf32, #tpu.memory_space<vmem>>, vector<1x1x128xf32>,
    return
  }
  func.func @transform_0(%arg0: i32, %arg1: i32) -> (i32, i32, i32) {
    %c0_i32 = arith.constant 0 : i32
    %c0_i32_0 = arith.constant 0 : i32
    return %arg0, %c0_i32, %arg1 : i32, i32, i32
  }
  func.func @transform_1(%arg0: i32, %arg1: i32) -> (i32, i32) {
    %c0_i32 = arith.constant 0 : i32
    %c0_i32_0 = arith.constant 0 : i32
    %c0_i32_1 = arith.constant 0 : i32
    return %c0_i32, %c0_i32_0 : i32, i32
  }
  func.func @transform_2(%arg0: i32, %arg1: i32) -> (i32, i32) {
    %c0_i32 = arith.constant 0 : i32
    %c0_i32_0 = arith.constant 0 : i32
    return %c0_i32, %arg1 : i32, i32
  }
  func.func @transform_3(%arg0: i32, %arg1: i32) -> (i32, i32) {
    %c0_i32 = arith.constant 0 : i32
    %c0_i32_0 = arith.constant 0 : i32
    %c0_i32_1 = arith.constant 0 : i32
    return %c0_i32, %c0_i32_0 : i32, i32
  }
  func.func @transform_4(%arg0: i32, %arg1: i32) -> (i32, i32) {
    %c0_i32 = arith.constant 0 : i32
    %c0_i32_0 = arith.constant 0 : i32
    %c0_i32_1 = arith.constant 0 : i32
    return %c0_i32, %c0_i32_0 : i32, i32
  }
  func.func @transform_5(%arg0: i32, %arg1: i32) -> (i32, i32, i32) {
    %c0_i32 = arith.constant 0 : i32
    %c0_i32_0 = arith.constant 0 : i32
    return %arg0, %c0_i32, %arg1 : i32, i32, i32
  }
}

</mosaic_0001>

<llo_original>
// kernel: _rank_forward_impl.1
$region0: #{_rank_forward_impl.1}
  #allocation0 [shape = 'u32[]', space=smem, size = 0x4, offset = 0x4, fixed_abs, tag = 'smem constant byte address 0x4 - core index']
  #allocation1 [shape = 'u32[144,128]{1,0:T(1,128)}', space=vmem, size = 0x12000, scoped, tag = 'internal scratch']
  #allocation2 [shape = 'f32[1,1]{1,0:T(1,128)S(6)}', space=smem, size = 0x200, scoped, tag = 'scoped memory for _rank_forward_impl.1']
  %s0 = inlined_call_operand.hbm [shape: bf16[2,32,128], index: 0, kind: input, shape index: {}]
  %s1 = inlined_call_operand.hbm [shape: bf16[48,32], index: 1, kind: input, shape index: {}]
  %s2 = inlined_call_operand.hbm [shape: f32[48,128], index: 2, kind: input, shape index: {}]
  %s3 = inlined_call_operand.hbm [shape: f32[48,1], index: 3, kind: input, shape index: {}]
  %s4 = inlined_call_operand.<no memory space> [shape: f32[1,1], index: 4, kind: input, shape index: {}]
  %s5 = inlined_call_operand.hbm [shape: f32[2,1,128], index: 5, kind: output, shape index: {}]
  %s6 = sld [smem:[#allocation0]]
  $region69: #{_rank_forward_impl.1} parent=0
    _
  %s8 = ssub.s32 1, %s6
  %s9 = scalar_select 0, %s8, %s6
  %10 = sst [smem:[#allocation2]] %s4
  $region1: #{_rank_forward_impl.1} parent=0
    #allocation3 [shape = 'u8[16384]{0}', space=vmem, size = 0x4000, scoped, tag = 'input window, operand 0']
    #allocation4 [shape = 's32[2]{0}', space=sflag, size = 0x8, scoped, tag = 'scoped memory for _rank_forward_impl.1']
    #allocation5 [shape = 's32[2]{0}', space=sflag, size = 0x8, scoped, tag = 'scoped memory for _rank_forward_impl.1']
    #allocation6 [shape = 'u8[12288]{0}', space=vmem, size = 0x3000, scoped, tag = 'input window, operand 1, single buffered']
    #allocation7 [shape = 's32[1]{0}', space=sflag, size = 0x4, scoped, tag = 'scoped memory for _rank_forward_impl.1']
    #allocation8 [shape = 'u8[24576]{0}', space=vmem, size = 0x6000, scoped, tag = 'input window, operand 2, single buffered']
    #allocation9 [shape = 'u8[24576]{0}', space=vmem, size = 0x6000, scoped, tag = 'input window, operand 3, single buffered']
    #allocation10 [shape = 's32[1]{0}', space=sflag, size = 0x4, scoped, tag = 'scoped memory for _rank_forward_impl.1']
    #allocation11 [shape = 'u8[1024]{0}', space=vmem, size = 0x400, scoped, tag = 'output window, operand 0']
    %11 = vsyncpa [#allocation4], 0
    %s12 = scalar_lea.sflag [#allocation4], 1
    %13 = vsyncpa %s12, 0
    %14 = vsyncpa [#allocation7], 0
    %15 = vsyncpa [#allocation10], 0
    %16 = vsyncpa [#allocation5], 0
    %s17 = scalar_lea.sflag [#allocation5], 1
    %18 = vsyncpa %s17, 0
    loop: start=0, step=1, limit=4
    $region2: #{_rank_forward_impl.1} parent=1 // loop_pre_header
      _
    $region3: #{_rank_forward_impl.1} parent=1 // loop_header
      %s20 = sphi 0, %s24
      %p21 = scmp.ge.s32.totalorder %s20, 4
      %s27 = sphi 0, %s39
      %s28 = sphi 0, %s35
      %s29 = sphi 0, %s27
      %s30 = sphi 0, %s28
      %s31 = sphi 0, %s29
      %s32 = sphi 0, %s30
      %s44 = sphi 0, %s46
      %s47 = sphi 0, %s44
      %s48 = sphi 0, %s47
      %s64 = sphi 0, %s48
      %s68 = sphi 0, %s68
      %s70 = sphi 0, %s68
      %s71 = sphi 0, %s70
      %s85 = sphi 0, %s71
      %s91 = sphi 0, %s93
      %s94 = sphi 0, %s91
      %s95 = sphi 0, %s94
      %s111 = sphi 0, %s95
      %s115 = sphi 0, %s115
      %s117 = sphi 0, %s115
      %s118 = sphi 0, %s117
      %s132 = sphi 0, %s118
      %s136 = sphi 0, %s136
      %s138 = sphi 0, %s136
      %s139 = sphi 0, %s138
      %s153 = sphi 0, %s139
      %s161 = sphi 0, %s163
      %s164 = sphi 0, %s161
      %s165 = sphi 0, %s164
      %s181 = sphi 0, %s165
    $region4: #{_rank_forward_impl.1} parent=1 // loop_header_branch
      %23 = sbr.rel (%p21) target = $region8
    $region5: #{_rank_forward_impl.1} parent=1 // loop_body
      %s25 = ssub.s32 %s20, 1
      %s26 = ssub.s32 %s20, 2
      %s33 = sadd.s32 1, %s28
      %p34 = scmp.ge.s32.totalorder %s33, 1
      %s35 = scalar_select %p34, 0, %s33
      %s36 = sadd.s32 1, %s27
      %s37 = scalar_select %p34, %s36, %s27
      %p38 = scmp.ge.s32.totalorder %s37, 2
      %s39 = scalar_select %p38, 0, %s37
      %s40 = ssub.s32 %s27, %s39
      %s41 = ssub.s32 %s28, %s35
      %s42 = sor.u32 %s40, %s41
      %p43 = scmp.eq.s32.totalorder %s42, 0
      %s45 = sadd.s32 %s44, 1
      %s46 = scalar_select %p43, %s44, %s45
      %p49 = pneg %p43
      %p50 = scmp.eq.s32.totalorder %s20, 1
      %p51 = por %p49, %p50
      %p52 = scmp.ne.s32.totalorder %s44, %s47
      %p53 = scmp.eq.s32.totalorder %s20, 0
      %p54 = por %p52, %p53
      %p55 = scmp.ne.s32.totalorder %s44, %s47
      %p56 = scmp.eq.s32.totalorder %s25, 1
      %p57 = por %p55, %p56
      %p58 = scmp.ne.s32.totalorder %s47, %s48
      %p59 = scmp.eq.s32.totalorder %s25, 0
      %p60 = por %p58, %p59
      %p61 = scmp.ne.s32.totalorder %s47, %s48
      %p62 = scmp.eq.s32.totalorder %s26, 1
      %p63 = por %p61, %p62
      %p65 = scmp.ne.s32.totalorder %s48, %s64
      %p66 = scmp.eq.s32.totalorder %s26, 0
      %p67 = por %p65, %p66
      %s69 = sadd.s32 %s68, 1
      %p72 = scmp.eq.s32.totalorder %s20, 1
      %p73 = scmp.ne.s32.totalorder %s68, %s70
      %p74 = scmp.eq.s32.totalorder %s20, 0
      %p75 = por %p73, %p74
      %p76 = scmp.ne.s32.totalorder %s68, %s70
      %p77 = scmp.eq.s32.totalorder %s25, 1
      %p78 = por %p76, %p77
      %p79 = scmp.ne.s32.totalorder %s70, %s71
      %p80 = scmp.eq.s32.totalorder %s25, 0
      %p81 = por %p79, %p80
      %p82 = scmp.ne.s32.totalorder %s70, %s71
      %p83 = scmp.eq.s32.totalorder %s26, 1
      %p84 = por %p82, %p83
      %p86 = scmp.ne.s32.totalorder %s71, %s85
      %p87 = scmp.eq.s32.totalorder %s26, 0
      %p88 = por %p86, %p87
      %s89 = ssub.s32 %s28, %s35
      %p90 = scmp.eq.s32.totalorder %s89, 0
      %s92 = sadd.s32 %s91, 1
      %s93 = scalar_select %p90, %s91, %s92
      %p96 = pneg %p90
      %p97 = scmp.eq.s32.totalorder %s20, 1
      %p98 = por %p96, %p97
      %p99 = scmp.ne.s32.totalorder %s91, %s94
      %p100 = scmp.eq.s32.totalorder %s20, 0
      %p101 = por %p99, %p100
      %p102 = scmp.ne.s32.totalorder %s91, %s94
      %p103 = scmp.eq.s32.totalorder %s25, 1
      %p104 = por %p102, %p103
      %p105 = scmp.ne.s32.totalorder %s94, %s95
      %p106 = scmp.eq.s32.totalorder %s25, 0
      %p107 = por %p105, %p106
      %p108 = scmp.ne.s32.totalorder %s94, %s95
      %p109 = scmp.eq.s32.totalorder %s26, 1
      %p110 = por %p108, %p109
      %p112 = scmp.ne.s32.totalorder %s95, %s111
      %p113 = scmp.eq.s32.totalorder %s26, 0
      %p114 = por %p112, %p113
      %s116 = sadd.s32 %s115, 1
      %p119 = scmp.eq.s32.totalorder %s20, 1
      %p120 = scmp.ne.s32.totalorder %s115, %s117
      %p121 = scmp.eq.s32.totalorder %s20, 0
      %p122 = por %p120, %p121
      %p123 = scmp.ne.s32.totalorder %s115, %s117
      %p124 = scmp.eq.s32.totalorder %s25, 1
      %p125 = por %p123, %p124
      %p126 = scmp.ne.s32.totalorder %s117, %s118
      %p127 = scmp.eq.s32.totalorder %s25, 0
      %p128 = por %p126, %p127
      %p129 = scmp.ne.s32.totalorder %s117, %s118
      %p130 = scmp.eq.s32.totalorder %s26, 1
      %p131 = por %p129, %p130
      %p133 = scmp.ne.s32.totalorder %s118, %s132
      %p134 = scmp.eq.s32.totalorder %s26, 0
      %p135 = por %p133, %p134
      %s137 = sadd.s32 %s136, 1
      %p140 = scmp.eq.s32.totalorder %s20, 1
      %p141 = scmp.ne.s32.totalorder %s136, %s138
      %p142 = scmp.eq.s32.totalorder %s20, 0
      %p143 = por %p141, %p142
      %p144 = scmp.ne.s32.totalorder %s136, %s138
      %p145 = scmp.eq.s32.totalorder %s25, 1
      %p146 = por %p144, %p145
      %p147 = scmp.ne.s32.totalorder %s138, %s139
      %p148 = scmp.eq.s32.totalorder %s25, 0
      %p149 = por %p147, %p148
      %p150 = scmp.ne.s32.totalorder %s138, %s139
      %p151 = scmp.eq.s32.totalorder %s26, 1
      %p152 = por %p150, %p151
      %p154 = scmp.ne.s32.totalorder %s139, %s153
      %p155 = scmp.eq.s32.totalorder %s26, 0
      %p156 = por %p154, %p155
      %s157 = ssub.s32 %s27, %s39
      %s158 = ssub.s32 %s28, %s35
      %s159 = sor.u32 %s157, %s158
      %p160 = scmp.eq.s32.totalorder %s159, 0
      %s162 = sadd.s32 %s161, 1
      %s163 = scalar_select %p160, %s161, %s162
      %p166 = pneg %p160
      %p167 = scmp.eq.s32.totalorder %s20, 1
      %p168 = por %p166, %p167
      %p169 = scmp.ne.s32.totalorder %s161, %s164
      %p170 = scmp.eq.s32.totalorder %s20, 0
      %p171 = por %p169, %p170
      %p172 = scmp.ne.s32.totalorder %s161, %s164
      %p173 = scmp.eq.s32.totalorder %s25, 1
      %p174 = por %p172, %p173
      %p175 = scmp.ne.s32.totalorder %s164, %s165
      %p176 = scmp.eq.s32.totalorder %s25, 0
      %p177 = por %p175, %p176
      %p178 = scmp.ne.s32.totalorder %s164, %s165
      %p179 = scmp.eq.s32.totalorder %s26, 1
      %p180 = por %p178, %p179
      %p182 = scmp.ne.s32.totalorder %s165, %s181
      %p183 = scmp.eq.s32.totalorder %s26, 0
      %p184 = por %p182, %p183
      %p185 = scmp.le.s32.totalorder 1, %s20
      %p186 = scmp.lt.s32.totalorder %s20, 3
      %p187 = pnand %p185, %p186
      %p188 = pneg %p187
      // Predicated region
      $region9: #{_rank_forward_impl.1} parent=5 // pred_check
        _
      $region10: #{_rank_forward_impl.1} parent=5 // pred_check_branch
        %190 = sbr.rel (%p187) target = $region12
      $region11: #{_rank_forward_impl.1} parent=5 // pred_region
        %s191 = ssub.s32 %s20, 1
        // Predicated region
        $region13: #{_rank_forward_impl.1} parent=11 // pred_check
          %p192 = pneg %p81
        $region14: #{_rank_forward_impl.1} parent=11 // pred_check_branch
          %194 = sbr.rel (%p192) target = $region16
        $region15: #{_rank_forward_impl.1} parent=11 // pred_region
          %s196 = ssub.s32 384, 384
          %197 = vsyncadd [#allocation7], %s196
          %s198 = sshll.u32 [#allocation6], 4
          %s199 = int_to_ptr.vmem [resolvable:$true] %s198
          %204 = dma.hbm_to_vmem [thread:$0]  %s1, 384, %s199, [#allocation7], 64, 64, 4
        $region16: #{_rank_forward_impl.1} parent=11 // pred_fallthru
          _
        // Predicated region
        $region17: #{_rank_forward_impl.1} parent=11 // pred_check
          %p205 = pneg %p107
        $region18: #{_rank_forward_impl.1} parent=11 // pred_check_branch
          %207 = sbr.rel (%p205) target = $region20
        $region19: #{_rank_forward_impl.1} parent=11 // pred_region
          %s209 = ssub.s32 768, 768
          %210 = vsyncadd [#allocation7], %s209
          %s211 = smul.addr %s30, 128
          %s212 = scalar_lea.hbm %s2, %s211
          %s213 = sshll.u32 [#allocation8], 4
          %s214 = int_to_ptr.vmem [resolvable:$true] %s213
          %219 = dma.hbm_to_vmem [thread:$0]  %s212, 768, %s214, [#allocation7], 128, 128, 8
        $region20: #{_rank_forward_impl.1} parent=11 // pred_fallthru
          _
        // Predicated region
        $region21: #{_rank_forward_impl.1} parent=11 // pred_check
          %p220 = pneg %p128
        $region22: #{_rank_forward_impl.1} parent=11 // pred_check_branch
          %222 = sbr.rel (%p220) target = $region24
        $region23: #{_rank_forward_impl.1} parent=11 // pred_region
          %s224 = ssub.s32 768, 768
          %225 = vsyncadd [#allocation10], %s224
          %s226 = sshll.u32 [#allocation9], 4
          %s227 = int_to_ptr.vmem [resolvable:$true] %s226
          %232 = dma.hbm_to_vmem [thread:$0]  %s3, 768, %s227, [#allocation10], 128, 128, 8
        $region24: #{_rank_forward_impl.1} parent=11 // pred_fallthru
          _
        // Predicated region
        $region25: #{_rank_forward_impl.1} parent=11 // pred_check
          %p233 = pneg %p149
        $region26: #{_rank_forward_impl.1} parent=11 // pred_check_branch
          %235 = sbr.rel (%p233) target = $region28
        $region27: #{_rank_forward_impl.1} parent=11 // pred_region
          _
        $region28: #{_rank_forward_impl.1} parent=11 // pred_fallthru
          _
      $region12: #{_rank_forward_impl.1} parent=5 // pred_fallthru
        _
      %p236 = scmp.lt.s32.totalorder %s20, 2
      // Predicated region
      $region29: #{_rank_forward_impl.1} parent=5 // pred_check
        %p237 = pneg %p236
      $region30: #{_rank_forward_impl.1} parent=5 // pred_check_branch
        %239 = sbr.rel (%p237) target = $region32
      $region31: #{_rank_forward_impl.1} parent=5 // pred_region
        // Predicated region
        $region33: #{_rank_forward_impl.1} parent=31 // pred_check
          %p240 = pneg %p54
        $region34: #{_rank_forward_impl.1} parent=31 // pred_check_branch
          %242 = sbr.rel (%p240) target = $region36
        $region35: #{_rank_forward_impl.1} parent=31 // pred_region
          %s243 = sand.u32 %s44, 1
          %s244 = scalar_lea.sflag [#allocation4], %s243
          %s245 = sand.u32 %s44, 1
          %s246 = smul.addr %s245, 16
          %s247 = scalar_lea.vmem [#allocation3], %s246
          %s249 = ssub.s32 256, 256
          %250 = vsyncadd %s244, %s249
          %s251 = smul.addr %s27, 4
          %s252 = sadd.s32 %s28, %s251
          %s253 = smul.addr %s252, 64
          %s254 = scalar_lea.hbm %s0, %s253
          %s255 = sshll.u32 %s247, 4
          %s256 = int_to_ptr.vmem [resolvable:$true] %s255
          %261 = dma.hbm_to_vmem [thread:$0]  %s254, 256, %s256, %s244, 64, 64, 4
        $region36: #{_rank_forward_impl.1} parent=31 // pred_fallthru
          _
      $region32: #{_rank_forward_impl.1} parent=5 // pred_fallthru
        _
      %p262 = scmp.le.s32.totalorder 1, %s20
      %p263 = scmp.lt.s32.totalorder %s20, 3
      %p264 = pnand %p262, %p263
      %p265 = pneg %p264
      // Predicated region
      $region37: #{_rank_forward_impl.1} parent=5 // pred_check
        _
      $region38: #{_rank_forward_impl.1} parent=5 // pred_check_branch
        %267 = sbr.rel (%p264) target = $region40
      $region39: #{_rank_forward_impl.1} parent=5 // pred_region
        %s268 = ssub.s32 %s20, 1
        %s269 = sand.u32 %s47, 1
        %s270 = scalar_lea.sflag [#allocation4], %s269
        %s271 = sand.u32 %s47, 1
        %s272 = smul.addr %s271, 16
        %s273 = scalar_lea.vmem [#allocation3], %s272
        // Predicated region
        $region41: #{_rank_forward_impl.1} parent=39 // pred_check
          %p274 = pneg %p60
        $region42: #{_rank_forward_impl.1} parent=39 // pred_check_branch
          %276 = sbr.rel (%p274) target = $region44
        $region43: #{_rank_forward_impl.1} parent=39 // pred_region
          %277 = dma.done %s270, 256
        $region44: #{_rank_forward_impl.1} parent=39 // pred_fallthru
          _
        // Predicated region
        $region45: #{_rank_forward_impl.1} parent=39 // pred_check
          %p278 = pneg %p81
        $region46: #{_rank_forward_impl.1} parent=39 // pred_check_branch
          %280 = sbr.rel (%p278) target = $region48
        $region47: #{_rank_forward_impl.1} parent=39 // pred_region
          %281 = dma.done [#allocation7], 384
        $region48: #{_rank_forward_impl.1} parent=39 // pred_fallthru
          _
        // Predicated region
        $region49: #{_rank_forward_impl.1} parent=39 // pred_check
          %p282 = pneg %p107
        $region50: #{_rank_forward_impl.1} parent=39 // pred_check_branch
          %284 = sbr.rel (%p282) target = $region52
        $region51: #{_rank_forward_impl.1} parent=39 // pred_region
          %285 = dma.done [#allocation7], 768
        $region52: #{_rank_forward_impl.1} parent=39 // pred_fallthru
          _
        // Predicated region
        $region53: #{_rank_forward_impl.1} parent=39 // pred_check
          %p286 = pneg %p128
        $region54: #{_rank_forward_impl.1} parent=39 // pred_check_branch
          %288 = sbr.rel (%p286) target = $region56
        $region55: #{_rank_forward_impl.1} parent=39 // pred_region
          %289 = dma.done [#allocation10], 768
        $region56: #{_rank_forward_impl.1} parent=39 // pred_fallthru
          _
        %s290 = sand.u32 %s47, 1
        %s291 = scalar_lea.sflag [#allocation4], %s290
        %s292 = sand.u32 %s47, 1
        %s293 = smul.addr %s292, 16
        %s294 = scalar_lea.vmem [#allocation3], %s293
        %p295 = pneg %p60
        %p296 = pneg %p57
        %p297 = pneg %p81
        %p298 = pneg %p78
        %p299 = pneg %p107
        %p300 = pneg %p104
        %p301 = pneg %p128
        %p302 = pneg %p125
        %p303 = pneg %p149
        %p304 = pneg %p146
        %p305 = pneg %p177
        %p306 = pneg %p174
        %s307 = sand.u32 %s164, 1
        %s308 = scalar_lea.sflag [#allocation5], %s307
        %s309 = sand.u32 %s164, 1
        %s310 = scalar_lea.vmem [#allocation11], %s309
        %v312 = vld [vmem:[#allocation6] sm:$0xf]
        %v313 = vld [vmem:[#allocation6 + $0x4] sm:$0xf]
        %v314 = vld [vmem:[#allocation6 + $0x8] sm:$0xf]
        %v315 = vld [vmem:[#allocation6 + $0xc] sm:$0xf]
        %v316 = vld [vmem:[#allocation6 + $0x10] sm:$0xf]
        %v317 = vld [vmem:[#allocation6 + $0x14] sm:$0xf]
        %v318 = vld [vmem:[%s273] sm:$0xf]
        %v319 = vld [vmem:[%s273 + $0x4] sm:$0xf]
        %v320 = vld [vmem:[%s273 + $0x8] sm:$0xf]
        %v321 = vld [vmem:[%s273 + $0xc] sm:$0xf]
        %v322 = vld [vmem:[#allocation8] sm:$0xff]
        %v323 = vld [vmem:[#allocation8 + $0x8] sm:$0xff]
        %v324 = vld [vmem:[#allocation8 + $0x10] sm:$0xff]
        %v325 = vld [vmem:[#allocation8 + $0x18] sm:$0xff]
        %v326 = vld [vmem:[#allocation8 + $0x20] sm:$0xff]
        %v327 = vld [vmem:[#allocation8 + $0x28] sm:$0xff]
        %v334 = vunpack.c.l.b16 %v312
        %v335 = vunpack.c.l.b16 %v313
        %v336 = vunpack.c.l.b16 %v314
        %v337 = vunpack.c.l.b16 %v315
        %v338 = vunpack.c.l.b16 %v316
        %v339 = vunpack.c.l.b16 %v317
        %v340 = vpack.c.b16 %v335, %v334
        %v341 = vpack.c.b16 %v337, %v336
        %v342 = vpack.c.b16 %v339, %v338
        %v347 = vunpack.c.l.b16 %v318
        %v348 = vunpack.c.l.b16 %v319
        %v349 = vunpack.c.l.b16 %v320
        %v350 = vunpack.c.l.b16 %v321
        %v351 = vpack.c.b16 %v348, %v347
        %v352 = vpack.c.b16 %v350, %v349
        %vm355 = vcmask 261120
        %v357 = vsel %vm355, %v340, 0
        %v360 = vsel %vm355, %v341, 0
        %v363 = vsel %vm355, %v342, 0
        %365 = vmatprep.subr.bf16.mxu0 0
        %366 = vmatpush1.bf16.msra.mxu0 %v351
        %367 = vmatprep.subr.bf16.mxu0 0
        %368 = vmatpush1.bf16.msra.mxu0 %v352
        %369 = vmatprep.subr.bf16.mxu0 0
        %370 = vmatpush1.bf16.msra.mxu0 0
        %371 = vmatprep.subr.bf16.mxu0 0
        %372 = vmatpush1.bf16.msra.mxu0 0
        %373 = vmatprep.subr.bf16.mxu0 0
        %374 = vmatpush1.bf16.msra.mxu0 0
        %375 = vmatprep.subr.bf16.mxu0 0
        %376 = vmatpush1.bf16.msra.mxu0 0
        %377 = vmatprep.subr.bf16.mxu0 0
        %378 = vmatpush1.bf16.msra.mxu0 0
        %379 = vmatprep.subr.bf16.mxu0 0
        %380 = vmatpush1.bf16.msra.mxu0 0
        %381 = vmatprep.subr.bf16.mxu0 0
        %382 = vmatpush1.bf16.msra.mxu0 0
        %383 = vmatprep.subr.bf16.mxu0 0
        %384 = vmatpush1.bf16.msra.mxu0 0
        %385 = vmatprep.subr.bf16.mxu0 0
        %386 = vmatpush1.bf16.msra.mxu0 0
        %387 = vmatprep.subr.bf16.mxu0 0
        %388 = vmatpush1.bf16.msra.mxu0 0
        %389 = vmatprep.subr.bf16.mxu0 0
        %390 = vmatpush1.bf16.msra.mxu0 0
        %391 = vmatprep.subr.bf16.mxu0 0
        %392 = vmatpush1.bf16.msra.mxu0 0
        %393 = vmatprep.subr.bf16.mxu0 0
        %394 = vmatpush1.bf16.msra.mxu0 0
        %395 = vmatprep.subr.bf16.mxu0 0
        %396 = vmatpush1.bf16.msra.mxu0 0
        %397 = vmatprep.mubr.bf16.mxu0 0
        %398 = vmatmul.mubr.bf16.gmra.mrb[0].mxu0 %v357
        %v399 = vpop.f32.mrb[0].mxu0
        %v400 = vadd.f32 %v322, %v399
        %v401 = vpop.f32.mrb[0].mxu0
        %v402 = vpop.f32.mrb[0].mxu0
        %v403 = vadd.f32 %v323, %v402
        %v404 = vpop.f32.mrb[0].mxu0
        %405 = vmatprep.mubr.bf16.mxu0 0
        %406 = vmatmul.mubr.bf16.gmra.mrb[0].mxu0 %v360
        %v407 = vpop.f32.mrb[0].mxu0
        %v408 = vadd.f32 %v324, %v407
        %v409 = vpop.f32.mrb[0].mxu0
        %v410 = vpop.f32.mrb[0].mxu0
        %v411 = vadd.f32 %v325, %v410
        %v412 = vpop.f32.mrb[0].mxu0
        %413 = vmatprep.mubr.bf16.mxu0 0
        %414 = vmatmul.mubr.bf16.gmra.mrb[0].mxu0 %v363
        %v415 = vpop.f32.mrb[0].mxu0
        %v416 = vadd.f32 %v326, %v415
        %v417 = vpop.f32.mrb[0].mxu0
        %v418 = vpop.f32.mrb[0].mxu0
        %v419 = vadd.f32 %v327, %v418
        %v420 = vpop.f32.mrb[0].mxu0
        %421 = vdwg.mxu0
        %v422 = vmax.f32 %v400, 0.0
        %v423 = vmax.f32 %v403, 0.0
        %v424 = vmax.f32 %v408, 0.0
        %v425 = vmax.f32 %v411, 0.0
        %v426 = vmax.f32 %v416, 0.0
        %v427 = vmax.f32 %v419, 0.0
        %v428 = vld [vmem:[#allocation9] sm:$0xff]
        %v429 = vld [vmem:[#allocation9 + $0x8] sm:$0xff]
        %v430 = vld [vmem:[#allocation9 + $0x10] sm:$0xff]
        %v431 = vld [vmem:[#allocation9 + $0x18] sm:$0xff]
        %v432 = vld [vmem:[#allocation9 + $0x20] sm:$0xff]
        %v433 = vld [vmem:[#allocation9 + $0x28] sm:$0xff]
        %435 = vset.pattern.permute.xlu0 0
        %436 = vperm.xlu0 %435, %v428
        %v437 = vpop.permute.xlu0 %436
        %440 = vset.pattern.permute.xlu0 0
        %441 = vperm.xlu0 %440, %v429
        %v442 = vpop.permute.xlu0 %441
        %445 = vset.pattern.permute.xlu0 0
        %446 = vperm.xlu0 %445, %v430
        %v447 = vpop.permute.xlu0 %446
        %450 = vset.pattern.permute.xlu0 0
        %451 = vperm.xlu0 %450, %v431
        %v452 = vpop.permute.xlu0 %451
        %455 = vset.pattern.permute.xlu0 0
        %456 = vperm.xlu0 %455, %v432
        %v457 = vpop.permute.xlu0 %456
        %460 = vset.pattern.permute.xlu0 0
        %461 = vperm.xlu0 %460, %v433
        %v462 = vpop.permute.xlu0 %461
        %v464 = vmul.f32 %v422, %v437
        %v465 = vmul.f32 %v423, %v442
        %v466 = vmul.f32 %v424, %v447
        %v467 = vmul.f32 %v425, %v452
        %v468 = vmul.f32 %v426, %v457
        %v469 = vmul.f32 %v427, %v462
        %v470 = vadd.f32 %v464, %v465
        %v471 = vadd.f32 %v470, %v466
        %v472 = vadd.f32 %v471, %v467
        %v473 = vadd.f32 %v472, %v468
        %v474 = vadd.f32 %v473, %v469
        %v475 = vrot.slane %v474, 4
        %v476 = vadd.f32 %v474, %v475
        %v477 = vrot.slane %v476, 2
        %v478 = vadd.f32 %v476, %v477
        %v479 = vrot.slane %v478, 1
        %v480 = vadd.f32 %v478, %v479
        %s481 = sld [smem:[#allocation2]]
        %v482 = vstv %s481
        %v483 = vadd.f32 %v480, %v482
        %484 = vst [vmem:[%s310] sm:$0x1] %v483
        %s485 = sand.u32 %s164, 1
        %s486 = scalar_lea.sflag [#allocation5], %s485
        %s487 = sand.u32 %s164, 1
        %s488 = scalar_lea.vmem [#allocation11], %s487
        // Predicated region
        $region57: #{_rank_forward_impl.1} parent=39 // pred_check
          %p489 = pneg %p174
        $region58: #{_rank_forward_impl.1} parent=39 // pred_check_branch
          %491 = sbr.rel (%p489) target = $region60
        $region59: #{_rank_forward_impl.1} parent=39 // pred_region
          %s493 = ssub.s32 16, 16
          %494 = vsyncadd %s486, %s493
          %s495 = sadd.s32 %s30, %s29
          %s496 = smul.addr %s495, 16
          %s497 = scalar_lea.hbm %s5, %s496
          %s499 = sshll.u32 %s488, 4
          %s500 = int_to_ptr.vmem [resolvable:$true] %s499
          %502 = dma.vmem_to_hbm [thread:$0]  %s500, 16, %s497, %s486
        $region60: #{_rank_forward_impl.1} parent=39 // pred_fallthru
          _
      $region40: #{_rank_forward_impl.1} parent=5 // pred_fallthru
        _
      %p503 = scmp.le.s32.totalorder 2, %s20
      // Predicated region
      $region61: #{_rank_forward_impl.1} parent=5 // pred_check
        %p504 = pneg %p503
      $region62: #{_rank_forward_impl.1} parent=5 // pred_check_branch
        %506 = sbr.rel (%p504) target = $region64
      $region63: #{_rank_forward_impl.1} parent=5 // pred_region
        %s507 = ssub.s32 %s20, 2
        // Predicated region
        $region65: #{_rank_forward_impl.1} parent=63 // pred_check
          %p508 = pneg %p180
        $region66: #{_rank_forward_impl.1} parent=63 // pred_check_branch
          %510 = sbr.rel (%p508) target = $region68
        $region67: #{_rank_forward_impl.1} parent=63 // pred_region
          %s511 = sand.u32 %s165, 1
          %s512 = scalar_lea.sflag [#allocation5], %s511
          %s513 = sand.u32 %s165, 1
          %s514 = scalar_lea.vmem [#allocation11], %s513
          %515 = dma.done %s512, 16
        $region68: #{_rank_forward_impl.1} parent=63 // pred_fallthru
          _
      $region64: #{_rank_forward_impl.1} parent=5 // pred_fallthru
        _
    $region6: #{_rank_forward_impl.1} parent=1 // loop_footer
      %s24 = sadd.s32 1, %s20
    $region7: #{_rank_forward_impl.1} parent=1 // loop_footer_branch
      %19 = sbr.rel target = $region3
    $region8: #{_rank_forward_impl.1} parent=1 // loop_exit
      _
    %516 = vsyncpa [#allocation4], 1
    %s517 = scalar_lea.sflag [#allocation4], 1
    %518 = vsyncpa %s517, 1
    %519 = vsyncpa [#allocation7], 1
    %520 = vsyncpa [#allocation10], 1
    %521 = vsyncpa [#allocation5], 1
    %s522 = scalar_lea.sflag [#allocation5], 1
    %523 = vsyncpa %s522, 1

</llo_original>
